<compile_context>
chip_gen: v6e
topology: v6e:2x2x1
jax: 0.10.0
libtpu: 0.0.40
codegen_flags: <defaults>
</compile_context>

<pallas_src>
import functools

import jax
import jax.numpy as jnp
from jax.experimental import pallas as pl
from jax.experimental.pallas import tpu as pltpu


def _mlp_packed_kernel(x_ref, w_ref, b_ref, o_ref, *, dims):
    """dims = (in_size, h1, h2, ..., out_size); len(dims)-1 linear layers.

    x_ref: [B, in_size]   (unpadded)
    w_ref: [L, P, P]      (zero-padded, P = max(dims))
    b_ref: [L, 1, P]      (zero-padded, f32)
    o_ref: [B, out_size]
    """
    num_linears = len(dims) - 1
    P = w_ref.shape[1]
    out_dim = dims[-1]

    h = x_ref[...]
    for i in range(num_linears):  # static -> fully unrolled straight-line code
        if i == 0 and dims[0] < P:
            # First layer: x is unpadded, so slice the packed weight's K rows.
            w = w_ref[i, : dims[0], :]
        else:
            # Later layers: padded rows/cols of W are zero and padded columns
            # of h are exactly zero, so the full PxP dot is exact.
            w = w_ref[i]
        b = b_ref[i]
        # MXU matmul, f32 accumulation. (h cast is a no-op for f32 weights.)
        y = jnp.dot(h.astype(w.dtype), w, preferred_element_type=jnp.float32)
        y = y + b.astype(jnp.float32)
        if i < num_linears - 1:
            # LipSwish: 0.909 * silu(y) == y * (0.909 * sigmoid(y)); EUP slot.
            y = y * (0.909 * jax.nn.sigmoid(y))
        h = y
    o_ref[...] = h[:, :out_dim].astype(o_ref.dtype)


def pack_mlp_params(params, dtype=jnp.float32):
    """ONE-TIME prep: pack per-layer (w, b) into padded [L,P,P] / [L,1,P].

    Weights are stored [in_features, out_features] (transpose of PyTorch
    nn.Linear.weight) so the kernel computes x @ W + b.
    """
    dims = (params[0][0].shape[0],) + tuple(w.shape[1] for w, _ in params)
    P = max(dims)
    L = len(params)
    w_packed = jnp.zeros((L, P, P), dtype)
    b_packed = jnp.zeros((L, 1, P), jnp.float32)
    for i, (w, b) in enumerate(params):
        w_packed = w_packed.at[i, : w.shape[0], : w.shape[1]].set(w.astype(dtype))
        b_packed = b_packed.at[i, 0, : b.shape[0]].set(b.astype(jnp.float32))
    return w_packed, b_packed, dims


def mlp_forward_pallas(x, w_packed, b_packed, dims):
    """Fused MLP forward: exactly one pallas_call, no per-call prep ops."""
    B = x.shape[0]
    out_dim = dims[-1]
    num_linears = len(dims) - 1

    flops = 2 * B * sum(dims[i] * dims[i + 1] for i in range(num_linears))
    transcendentals = B * sum(dims[1:-1])  # one sigmoid per hidden activation
    bytes_accessed = (
        x.size * x.dtype.itemsize
        + w_packed.size * w_packed.dtype.itemsize
        + b_packed.size * b_packed.dtype.itemsize
        + B * out_dim * x.dtype.itemsize
    )

    kernel = functools.partial(_mlp_packed_kernel, dims=dims)
    vmem = pl.BlockSpec(memory_space=pltpu.MemorySpace.VMEM)

    return pl.pallas_call(
        kernel,
        out_shape=jax.ShapeDtypeStruct((B, out_dim), x.dtype),
        in_specs=[vmem, vmem, vmem],
        out_specs=vmem,
        cost_estimate=pl.CostEstimate(
            flops=flops,
            transcendentals=transcendentals,
            bytes_accessed=bytes_accessed,
        ),
    )(x, w_packed, b_packed)


def init_mlp_params(key, in_size, out_size, hidden_dim, num_layers,
                    dtype=jnp.float32):
    """Deterministic init mirroring nn.Linear default (U[-1/sqrt(fan_in), +]).

    Layer dims mirror the PyTorch MLP: Linear(in,h), (num_layers-1) x
    Linear(h,h), Linear(h,out).
    """
    dims = [in_size] + [hidden_dim] * num_layers + [out_size]
    params = []
    for fan_in, fan_out in zip(dims[:-1], dims[1:]):
        key, kw, kb = jax.random.split(key, 3)
        bound = 1.0 / (fan_in ** 0.5)
        w = jax.random.uniform(kw, (fan_in, fan_out), dtype,
                               minval=-bound, maxval=bound)
        b = jax.random.uniform(kb, (fan_out,), dtype,
                               minval=-bound, maxval=bound)
        params.append((w, b))
    return params


def mlp_forward_ref(x, params):
    """Pure-JAX f32 reference matching the PyTorch module's semantics."""
    n = len(params)
    h = x.astype(jnp.float32)
    for i, (w, b) in enumerate(params):
        y = jnp.dot(h, w.astype(jnp.float32),
                    preferred_element_type=jnp.float32) + b.astype(jnp.float32)
        if i < n - 1:
            y = y * (0.909 * jax.nn.sigmoid(y))
        h = y
    return h.astype(x.dtype)


if __name__ == "__main__":
    # Small shapes consistent with the module's forward:
    batch = 8
    in_size = 4
    out_size = 4
    hidden_dim = 32
    num_layers = 3  # -> 4 Linear layers total, matching the PyTorch MLP

    key = jax.random.PRNGKey(0)
    key, kx = jax.random.split(key)
    x = jax.random.normal(kx, (batch, in_size), dtype=jnp.float32)
    params = init_mlp_params(key, in_size, out_size, hidden_dim, num_layers)

    # One-time packing (padding/casts happen here, never per call).
    w_packed, b_packed, dims = pack_mlp_params(params)

    out = jax.block_until_ready(mlp_forward_pallas(x, w_packed, b_packed, dims))
    ref = mlp_forward_ref(x, params)
    assert out.shape == (batch, out_size)
    assert jnp.allclose(out, ref, atol=1e-5, rtol=1e-5)

    # Second call with fresh data: no per-call prep ops, same packed params.
    key, kx2 = jax.random.split(key)
    x2 = jax.random.normal(kx2, (batch, in_size), dtype=jnp.float32)
    out2 = jax.block_until_ready(mlp_forward_pallas(x2, w_packed, b_packed, dims))
    assert jnp.allclose(out2, mlp_forward_ref(x2, params), atol=1e-5, rtol=1e-5)

    print("KERNEL_OK")
</pallas_src>

<mosaic_0001>
module attributes {stable_mosaic.version = 11 : i64} {
  func.func @_mlp_packed_kernel(%arg0: memref<8x4xf32, #tpu.memory_space<vmem>>, %arg1: memref<4x32x32xf32, #tpu.memory_space<vmem>>, %arg2: memref<4x1x32xf32, #tpu.memory_space<vmem>>, %arg3: memref<8x4xf32, #tpu.memory_space<vmem>>) attributes {dimension_semantics = [], scalar_prefetch = 0 : i64, scratch_operands = 0 : i64, tpu.core_type = #tpu.core_type<tc>} {
    %c0 = arith.constant 0 : index
    %c0_0 = arith.constant 0 : index
    %0 = vector.load %arg0[%c0, %c0_0] : memref<8x4xf32, #tpu.memory_space<vmem>>, vector<8x4xf32>
    %c0_1 = arith.constant 0 : index
    %c0_2 = arith.constant 0 : index
    %c0_3 = arith.constant 0 : index
    %1 = vector.load %arg1[%c0_1, %c0_2, %c0_3] : memref<4x32x32xf32, #tpu.memory_space<vmem>>, vector<1x4x32xf32>
    %2 = vector.shape_cast %1 : vector<1x4x32xf32> to vector<4x32xf32>
    %c0_4 = arith.constant 0 : index
    %c0_5 = arith.constant 0 : index
    %c0_6 = arith.constant 0 : index
    %3 = vector.load %arg2[%c0_4, %c0_5, %c0_6] : memref<4x1x32xf32, #tpu.memory_space<vmem>>, vector<1x1x32xf32>
    %4 = vector.shape_cast %3 : vector<1x1x32xf32> to vector<1x32xf32>
    %cst = arith.constant dense<0.000000e+00> : vector<8x32xf32>
    %5 = tpu.matmul %0, %2, %cst {dimension_numbers = #tpu.dot_dimension_numbers<[1], [0], [0], [1], [0, 0, 1, 1], [], []>} : vector<8x4xf32>, vector<4x32xf32>, vector<8x32xf32> -> vector<8x32xf32>
    %6 = vector.broadcast %4 : vector<1x32xf32> to vector<8x32xf32>
    %7 = arith.addf %5, %6 : vector<8x32xf32>
    %8 = arith.negf %7 : vector<8x32xf32>
    %9 = math.exp %8 : vector<8x32xf32>
    %cst_7 = arith.constant 1.000000e+00 : f32
    %10 = vector.broadcast %cst_7 : f32 to vector<8x32xf32>
    %11 = arith.addf %10, %9 : vector<8x32xf32>
    %12 = arith.divf %10, %11 : vector<8x32xf32>
    %cst_8 = arith.constant 0.908999979 : f32
    %13 = vector.broadcast %cst_8 : f32 to vector<8x32xf32>
    %14 = arith.mulf %13, %12 : vector<8x32xf32>
    %15 = arith.mulf %7, %14 : vector<8x32xf32>
    %c1 = arith.constant 1 : index
    %c0_9 = arith.constant 0 : index
    %c0_10 = arith.constant 0 : index
    %16 = vector.load %arg1[%c1, %c0_9, %c0_10] : memref<4x32x32xf32, #tpu.memory_space<vmem>>, vector<1x32x32xf32>
    %17 = vector.shape_cast %16 : vector<1x32x32xf32> to vector<32x32xf32>
    %c1_11 = arith.constant 1 : index
    %c0_12 = arith.constant 0 : index
    %c0_13 = arith.constant 0 : index
    %18 = vector.load %arg2[%c1_11, %c0_12, %c0_13] : memref<4x1x32xf32, #tpu.memory_space<vmem>>, vector<1x1x32xf32>
    %19 = vector.shape_cast %18 : vector<1x1x32xf32> to vector<1x32xf32>
    %cst_14 = arith.constant dense<0.000000e+00> : vector<8x32xf32>
    %20 = tpu.matmul %15, %17, %cst_14 {dimension_numbers = #tpu.dot_dimension_numbers<[1], [0], [0], [1], [0, 0, 1, 1], [], []>} : vector<8x32xf32>, vector<32x32xf32>, vector<8x32xf32> -> vector<8x32xf32>
    %21 = vector.broadcast %19 : vector<1x32xf32> to vector<8x32xf32>
    %22 = arith.addf %20, %21 : vector<8x32xf32>
    %23 = arith.negf %22 : vector<8x32xf32>
    %24 = math.exp %23 : vector<8x32xf32>
    %cst_15 = arith.constant 1.000000e+00 : f32
    %25 = vector.broadcast %cst_15 : f32 to vector<8x32xf32>
    %26 = arith.addf %25, %24 : vector<8x32xf32>
    %27 = arith.divf %25, %26 : vector<8x32xf32>
    %cst_16 = arith.constant 0.908999979 : f32
    %28 = vector.broadcast %cst_16 : f32 to vector<8x32xf32>
    %29 = arith.mulf %28, %27 : vector<8x32xf32>
    %30 = arith.mulf %22, %29 : vector<8x32xf32>
    %c2 = arith.constant 2 : index
    %c0_17 = arith.constant 0 : index
    %c0_18 = arith.constant 0 : index
    %31 = vector.load %arg1[%c2, %c0_17, %c0_18] : memref<4x32x32xf32, #tpu.memory_space<vmem>>, vector<1x32x32xf32>
    %32 = vector.shape_cast %31 : vector<1x32x32xf32> to vector<32x32xf32>
    %c2_19 = arith.constant 2 : index
    %c0_20 = arith.constant 0 : index
    %c0_21 = arith.constant 0 : index
    %33 = vector.load %arg2[%c2_19, %c0_20, %c0_21] : memref<4x1x32xf32, #tpu.memory_space<vmem>>, vector<1x1x32xf32>
    %34 = vector.shape_cast %33 : vector<1x1x32xf32> to vector<1x32xf32>
    %cst_22 = arith.constant dense<0.000000e+00> : vector<8x32xf32>
    %35 = tpu.matmul %30, %32, %cst_22 {dimension_numbers = #tpu.dot_dimension_numbers<[1], [0], [0], [1], [0, 0, 1, 1], [], []>} : vector<8x32xf32>, vector<32x32xf32>, vector<8x32xf32> -> vector<8x32xf32>
    %36 = vector.broadcast %34 : vector<1x32xf32> to vector<8x32xf32>
    %37 = arith.addf %35, %36 : vector<8x32xf32>
    %38 = arith.negf %37 : vector<8x32xf32>
    %39 = math.exp %38 : vector<8x32xf32>
    %cst_23 = arith.constant 1.000000e+00 : f32
    %40 = vector.broadcast %cst_23 : f32 to vector<8x32xf32>
    %41 = arith.addf %40, %39 : vector<8x32xf32>
    %42 = arith.divf %40, %41 : vector<8x32xf32>
    %cst_24 = arith.constant 0.908999979 : f32
    %43 = vector.broadcast %cst_24 : f32 to vector<8x32xf32>
    %44 = arith.mulf %43, %42 : vector<8x32xf32>
    %45 = arith.mulf %37, %44 : vector<8x32xf32>
    %c3 = arith.constant 3 : index
    %c0_25 = arith.constant 0 : index
    %c0_26 = arith.constant 0 : index
    %46 = vector.load %arg1[%c3, %c0_25, %c0_26] : memref<4x32x32xf32, #tpu.memory_space<vmem>>, vector<1x32x32xf32>
    %47 = vector.shape_cast %46 : vector<1x32x32xf32> to vector<32x32xf32>
    %c3_27 = arith.constant 3 : index
    %c0_28 = arith.constant 0 : index
    %c0_29 = arith.constant 0 : index
    %48 = vector.load %arg2[%c3_27, %c0_28, %c0_29] : memref<4x1x32xf32, #tpu.memory_space<vmem>>, vector<1x1x32xf32>
    %49 = vector.shape_cast %48 : vector<1x1x32xf32> to vector<1x32xf32>
    %cst_30 = arith.constant dense<0.000000e+00> : vector<8x32xf32>
    %50 = tpu.matmul %45, %47, %cst_30 {dimension_numbers = #tpu.dot_dimension_numbers<[1], [0], [0], [1], [0, 0, 1, 1], [], []>} : vector<8x32xf32>, vector<32x32xf32>, vector<8x32xf32> -> vector<8x32xf32>
    %51 = vector.broadcast %49 : vector<1x32xf32> to vector<8x32xf32>
    %52 = arith.addf %50, %51 : vector<8x32xf32>
    %53 = vector.extract_strided_slice %52 {offsets = [0, 0], sizes = [8, 4], strides = [1, 1]} : vector<8x32xf32> to vector<8x4xf32>
    %c0_31 = arith.constant 0 : index
    %c0_32 = arith.constant 0 : index
    %54 = vector.load %arg3[%c0_31, %c0_32] : memref<8x4xf32, #tpu.memory_space<vmem>>, vector<8x4xf32>
    tpu.vector_store %arg3[%c0_31, %c0_32], %53 {strides = array<i32>} : memref<8x4xf32, #tpu.memory_space<vmem>>, vector<8x4xf32>,
    return
  }
}

</mosaic_0001>

<llo_original>
// kernel: tpu_custom_call.1
$region0: #{tpu_custom_call.1}
  #allocation0 [shape = 'u32[]', space=smem, size = 0x4, offset = 0x4, fixed_abs, tag = 'smem constant byte address 0x4 - core index']
  #allocation1 [shape = 'u32[144,128]{1,0:T(1,128)}', space=vmem, size = 0x12000, scoped, tag = 'internal scratch']
  %s0 = inlined_call_operand.vmem [shape: f32[8,4], index: 0, kind: input, shape index: {}]
  %s1 = inlined_call_operand.hbm [shape: f32[4,32,32], index: 1, kind: input, shape index: {}]
  %s2 = inlined_call_operand.vmem [shape: f32[4,1,32], index: 2, kind: input, shape index: {}]
  %s3 = inlined_call_operand.vmem [shape: f32[8,4], index: 3, kind: output, shape index: {}]
  %s4 = sld [smem:[#allocation0]]
  $region26: #{tpu_custom_call.1} parent=0
    _
  %s6 = ssub.s32 1, %s4
  %s7 = scalar_select 0, %s6, %s4
  $region1: #{tpu_custom_call.1} parent=0
    #allocation2 [shape = 'u8[65536]{0}', space=vmem, size = 0x10000, scoped, tag = 'input window, operand 1, single buffered']
    #allocation3 [shape = 's32[1]{0}', space=sflag, size = 0x4, scoped, tag = 'scoped memory for tpu_custom_call.1']
    %8 = vsyncpa [#allocation3], 0
    // Predicated region
    $region2: #{tpu_custom_call.1} parent=1 // pred_check
      _
    $region3: #{tpu_custom_call.1} parent=1 // pred_check_branch
      %10 = sbr.rel (0) target = $region5
    $region4: #{tpu_custom_call.1} parent=1 // pred_region
      _
    $region5: #{tpu_custom_call.1} parent=1 // pred_fallthru
      _
    // Predicated region
    $region6: #{tpu_custom_call.1} parent=1 // pred_check
      _
    $region7: #{tpu_custom_call.1} parent=1 // pred_check_branch
      %12 = sbr.rel (0) target = $region9
    $region8: #{tpu_custom_call.1} parent=1 // pred_region
      %s14 = ssub.s32 2048, 2048
      %15 = vsyncadd [#allocation3], %s14
      %s16 = sshll.u32 [#allocation2], 4
      %s17 = int_to_ptr.vmem [resolvable:$true] %s16
      %22 = dma.hbm_to_vmem [thread:$0]  %s1, 2048, %s17, [#allocation3], 128, 128, 8
    $region9: #{tpu_custom_call.1} parent=1 // pred_fallthru
      _
    // Predicated region
    $region10: #{tpu_custom_call.1} parent=1 // pred_check
      _
    $region11: #{tpu_custom_call.1} parent=1 // pred_check_branch
      %24 = sbr.rel (0) target = $region13
    $region12: #{tpu_custom_call.1} parent=1 // pred_region
      _
    $region13: #{tpu_custom_call.1} parent=1 // pred_fallthru
      _
    // Predicated region
    $region14: #{tpu_custom_call.1} parent=1 // pred_check
      _
    $region15: #{tpu_custom_call.1} parent=1 // pred_check_branch
      %26 = sbr.rel (0) target = $region17
    $region16: #{tpu_custom_call.1} parent=1 // pred_region
      %27 = dma.done [#allocation3], 2048
    $region17: #{tpu_custom_call.1} parent=1 // pred_fallthru
      _
    %v28 = vld [vmem:[%s0] sm:$0xff]
    %v29 = vld [vmem:[#allocation2] sm:$0xf]
    %v30 = vld [vmem:[%s2] sm:$0x1]
    %v32 = vlaneseq
    %v33 = vshrl.u32 %v32, 7
    %v34 = vsub.s32 0, %v33
    %v35 = vrot.slane %v30, %v34
    %vm37 = vcmask 31744
    %v39 = vsel %vm37, %v28, 0
    %vm41 = vcmask 1043456
    %v43 = vsel %vm41, %v29, 0
    %45 = vmatprep.subr.mxu0 0.0
    %46 = vmatpush1.msra.mxu0 0.0
    %47 = vmatprep.subr.mxu0 0.0
    %48 = vmatpush1.msra.mxu0 0.0
    %49 = vmatprep.subr.mxu0 0.0
    %50 = vmatpush1.msra.mxu0 0.0
    %51 = vmatprep.subr.mxu0 0.0
    %52 = vmatpush1.msra.mxu0 0.0
    %53 = vmatprep.subr.mxu0 0.0
    %54 = vmatpush1.msra.mxu0 0.0
    %55 = vmatprep.subr.mxu0 0.0
    %56 = vmatpush1.msra.mxu0 0.0
    %57 = vmatprep.subr.mxu0 0.0
    %58 = vmatpush1.msra.mxu0 0.0
    %59 = vmatprep.subr.mxu0 0.0
    %60 = vmatpush1.msra.mxu0 0.0
    %61 = vmatprep.subr.mxu0 0.0
    %62 = vmatpush1.msra.mxu0 0.0
    %63 = vmatprep.subr.mxu0 0.0
    %64 = vmatpush1.msra.mxu0 0.0
    %65 = vmatprep.subr.mxu0 0.0
    %66 = vmatpush1.msra.mxu0 0.0
    %67 = vmatprep.subr.mxu0 0.0
    %68 = vmatpush1.msra.mxu0 0.0
    %69 = vmatprep.subr.mxu0 0.0
    %70 = vmatpush1.msra.mxu0 0.0
    %71 = vmatprep.subr.mxu0 0.0
    %72 = vmatpush1.msra.mxu0 0.0
    %73 = vmatprep.subr.mxu0 0.0
    %74 = vmatpush1.msra.mxu0 0.0
    %75 = vmatprep.subr.mxu0 0.0
    %76 = vmatpush1.msra.mxu0 %v43
    %77 = vmatprep.subr.mxu0 0.0
    %78 = vmatpush2.msra.mxu0 0.0
    %79 = vmatprep.subr.mxu0 0.0
    %80 = vmatpush2.msra.mxu0 0.0
    %81 = vmatprep.subr.mxu0 0.0
    %82 = vmatpush2.msra.mxu0 0.0
    %83 = vmatprep.subr.mxu0 0.0
    %84 = vmatpush2.msra.mxu0 0.0
    %85 = vmatprep.subr.mxu0 0.0
    %86 = vmatpush2.msra.mxu0 0.0
    %87 = vmatprep.subr.mxu0 0.0
    %88 = vmatpush2.msra.mxu0 0.0
    %89 = vmatprep.subr.mxu0 0.0
    %90 = vmatpush2.msra.mxu0 0.0
    %91 = vmatprep.subr.mxu0 0.0
    %92 = vmatpush2.msra.mxu0 0.0
    %93 = vmatprep.subr.mxu0 0.0
    %94 = vmatpush2.msra.mxu0 0.0
    %95 = vmatprep.subr.mxu0 0.0
    %96 = vmatpush2.msra.mxu0 0.0
    %97 = vmatprep.subr.mxu0 0.0
    %98 = vmatpush2.msra.mxu0 0.0
    %99 = vmatprep.subr.mxu0 0.0
    %100 = vmatpush2.msra.mxu0 0.0
    %101 = vmatprep.subr.mxu0 0.0
    %102 = vmatpush2.msra.mxu0 0.0
    %103 = vmatprep.subr.mxu0 0.0
    %104 = vmatpush2.msra.mxu0 0.0
    %105 = vmatprep.subr.mxu0 0.0
    %106 = vmatpush2.msra.mxu0 0.0
    %107 = vmatprep.subr.mxu0 0.0
    %108 = vmatpush2.msra.mxu0 0.0
    %109 = vmatprep.mubr.f32.mxu0 0.0
    %110 = vmatmul.mubr.f32.gmra.mxu0 %v39
    %v111 = vpop.f32.mrf.mxu0
    %v112 = vadd.f32 %v35, %v111
    %v113 = vpop.f32.mrf.mxu0
    %114 = vdwg.mxu0
    %v115 = vxor.u32 %v112, 2147483648
    %v116 = vmul.f32 %v115, 1.442695
    %v117 = vpow.pop %v116
    %v118 = vadd.f32 %v117, 1.0
    %v119 = vrcp.pop %v118
    %v120 = vmul.f32 1.0, %v119
    %v121 = vmul.f32 %v120, 0.909
    %v122 = vmul.f32 %v112, %v121
    %s123 = scalar_lea.vmem [#allocation2], 32
    %v124 = vld [vmem:[%s123] sm:$0xff]
    %v125 = vld [vmem:[%s123 + $0x8] sm:$0xff]
    %v126 = vld [vmem:[%s123 + $0x10] sm:$0xff]
    %v127 = vld [vmem:[%s123 + $0x18] sm:$0xff]
    %s128 = scalar_lea.vmem %s2, 1
    %v129 = vld [vmem:[%s128] sm:$0x1]
    %v131 = vlaneseq
    %v132 = vshrl.u32 %v131, 7
    %v133 = vsub.s32 0, %v132
    %v134 = vrot.slane %v129, %v133
    %vm136 = vcmask 261120
    %v138 = vsel %vm136, %v122, 0
    %140 = vmatprep.subr.mxu0 0.0
    %141 = vmatpush1.msra.mxu0 0.0
    %142 = vmatprep.subr.mxu0 0.0
    %143 = vmatpush1.msra.mxu0 0.0
    %144 = vmatprep.subr.mxu0 0.0
    %145 = vmatpush1.msra.mxu0 0.0
    %146 = vmatprep.subr.mxu0 0.0
    %147 = vmatpush1.msra.mxu0 0.0
    %148 = vmatprep.subr.mxu0 0.0
    %149 = vmatpush1.msra.mxu0 0.0
    %150 = vmatprep.subr.mxu0 0.0
    %151 = vmatpush1.msra.mxu0 0.0
    %152 = vmatprep.subr.mxu0 0.0
    %153 = vmatpush1.msra.mxu0 0.0
    %154 = vmatprep.subr.mxu0 0.0
    %155 = vmatpush1.msra.mxu0 0.0
    %156 = vmatprep.subr.mxu0 0.0
    %157 = vmatpush1.msra.mxu0 0.0
    %158 = vmatprep.subr.mxu0 0.0
    %159 = vmatpush1.msra.mxu0 0.0
    %160 = vmatprep.subr.mxu0 0.0
    %161 = vmatpush1.msra.mxu0 0.0
    %162 = vmatprep.subr.mxu0 0.0
    %163 = vmatpush1.msra.mxu0 0.0
    %164 = vmatprep.subr.mxu0 0.0
    %165 = vmatpush1.msra.mxu0 %v127
    %166 = vmatprep.subr.mxu0 0.0
    %167 = vmatpush1.msra.mxu0 %v126
    %168 = vmatprep.subr.mxu0 0.0
    %169 = vmatpush1.msra.mxu0 %v125
    %170 = vmatprep.subr.mxu0 0.0
    %171 = vmatpush1.msra.mxu0 %v124
    %172 = vmatprep.subr.mxu0 0.0
    %173 = vmatpush2.msra.mxu0 0.0
    %174 = vmatprep.subr.mxu0 0.0
    %175 = vmatpush2.msra.mxu0 0.0
    %176 = vmatprep.subr.mxu0 0.0
    %177 = vmatpush2.msra.mxu0 0.0
    %178 = vmatprep.subr.mxu0 0.0
    %179 = vmatpush2.msra.mxu0 0.0
    %180 = vmatprep.subr.mxu0 0.0
    %181 = vmatpush2.msra.mxu0 0.0
    %182 = vmatprep.subr.mxu0 0.0
    %183 = vmatpush2.msra.mxu0 0.0
    %184 = vmatprep.subr.mxu0 0.0
    %185 = vmatpush2.msra.mxu0 0.0
    %186 = vmatprep.subr.mxu0 0.0
    %187 = vmatpush2.msra.mxu0 0.0
    %188 = vmatprep.subr.mxu0 0.0
    %189 = vmatpush2.msra.mxu0 0.0
    %190 = vmatprep.subr.mxu0 0.0
    %191 = vmatpush2.msra.mxu0 0.0
    %192 = vmatprep.subr.mxu0 0.0
    %193 = vmatpush2.msra.mxu0 0.0
    %194 = vmatprep.subr.mxu0 0.0
    %195 = vmatpush2.msra.mxu0 0.0
    %196 = vmatprep.subr.mxu0 0.0
    %197 = vmatpush2.msra.mxu0 0.0
    %198 = vmatprep.subr.mxu0 0.0
    %199 = vmatpush2.msra.mxu0 0.0
    %200 = vmatprep.subr.mxu0 0.0
    %201 = vmatpush2.msra.mxu0 0.0
    %202 = vmatprep.subr.mxu0 0.0
    %203 = vmatpush2.msra.mxu0 0.0
    %204 = vmatprep.mubr.f32.mxu0 0.0
    %205 = vmatmul.mubr.f32.gmra.mxu0 %v138
    %v206 = vpop.f32.mrf.mxu0
    %v207 = vadd.f32 %v134, %v206
    %v208 = vpop.f32.mrf.mxu0
    %209 = vdwg.mxu0
    %v210 = vxor.u32 %v207, 2147483648
    %v211 = vmul.f32 %v210, 1.442695
    %v212 = vpow.pop %v211
    %v213 = vadd.f32 %v212, 1.0
    %v214 = vrcp.pop %v213
    %v215 = vmul.f32 1.0, %v214
    %v216 = vmul.f32 %v215, 0.909
    %v217 = vmul.f32 %v207, %v216
    %s218 = scalar_lea.vmem [#allocation2], 64
    %v219 = vld [vmem:[%s218] sm:$0xff]
    %v220 = vld [vmem:[%s218 + $0x8] sm:$0xff]
    %v221 = vld [vmem:[%s218 + $0x10] sm:$0xff]
    %v222 = vld [vmem:[%s218 + $0x18] sm:$0xff]
    %s223 = scalar_lea.vmem %s2, 2
    %v224 = vld [vmem:[%s223] sm:$0x1]
    %v226 = vlaneseq
    %v227 = vshrl.u32 %v226, 7
    %v228 = vsub.s32 0, %v227
    %v229 = vrot.slane %v224, %v228
    %v232 = vsel %vm136, %v217, 0
    %234 = vmatprep.subr.mxu0 0.0
    %235 = vmatpush1.msra.mxu0 0.0
    %236 = vmatprep.subr.mxu0 0.0
    %237 = vmatpush1.msra.mxu0 0.0
    %238 = vmatprep.subr.mxu0 0.0
    %239 = vmatpush1.msra.mxu0 0.0
    %240 = vmatprep.subr.mxu0 0.0
    %241 = vmatpush1.msra.mxu0 0.0
    %242 = vmatprep.subr.mxu0 0.0
    %243 = vmatpush1.msra.mxu0 0.0
    %244 = vmatprep.subr.mxu0 0.0
    %245 = vmatpush1.msra.mxu0 0.0
    %246 = vmatprep.subr.mxu0 0.0
    %247 = vmatpush1.msra.mxu0 0.0
    %248 = vmatprep.subr.mxu0 0.0
    %249 = vmatpush1.msra.mxu0 0.0
    %250 = vmatprep.subr.mxu0 0.0
    %251 = vmatpush1.msra.mxu0 0.0
    %252 = vmatprep.subr.mxu0 0.0
    %253 = vmatpush1.msra.mxu0 0.0
    %254 = vmatprep.subr.mxu0 0.0
    %255 = vmatpush1.msra.mxu0 0.0
    %256 = vmatprep.subr.mxu0 0.0
    %257 = vmatpush1.msra.mxu0 0.0
    %258 = vmatprep.subr.mxu0 0.0
    %259 = vmatpush1.msra.mxu0 %v222
    %260 = vmatprep.subr.mxu0 0.0
    %261 = vmatpush1.msra.mxu0 %v221
    %262 = vmatprep.subr.mxu0 0.0
    %263 = vmatpush1.msra.mxu0 %v220
    %264 = vmatprep.subr.mxu0 0.0
    %265 = vmatpush1.msra.mxu0 %v219
    %266 = vmatprep.subr.mxu0 0.0
    %267 = vmatpush2.msra.mxu0 0.0
    %268 = vmatprep.subr.mxu0 0.0
    %269 = vmatpush2.msra.mxu0 0.0
    %270 = vmatprep.subr.mxu0 0.0
    %271 = vmatpush2.msra.mxu0 0.0
    %272 = vmatprep.subr.mxu0 0.0
    %273 = vmatpush2.msra.mxu0 0.0
    %274 = vmatprep.subr.mxu0 0.0
    %275 = vmatpush2.msra.mxu0 0.0
    %276 = vmatprep.subr.mxu0 0.0
    %277 = vmatpush2.msra.mxu0 0.0
    %278 = vmatprep.subr.mxu0 0.0
    %279 = vmatpush2.msra.mxu0 0.0
    %280 = vmatprep.subr.mxu0 0.0
    %281 = vmatpush2.msra.mxu0 0.0
    %282 = vmatprep.subr.mxu0 0.0
    %283 = vmatpush2.msra.mxu0 0.0
    %284 = vmatprep.subr.mxu0 0.0
    %285 = vmatpush2.msra.mxu0 0.0
    %286 = vmatprep.subr.mxu0 0.0
    %287 = vmatpush2.msra.mxu0 0.0
    %288 = vmatprep.subr.mxu0 0.0
    %289 = vmatpush2.msra.mxu0 0.0
    %290 = vmatprep.subr.mxu0 0.0
    %291 = vmatpush2.msra.mxu0 0.0
    %292 = vmatprep.subr.mxu0 0.0
    %293 = vmatpush2.msra.mxu0 0.0
    %294 = vmatprep.subr.mxu0 0.0
    %295 = vmatpush2.msra.mxu0 0.0
    %296 = vmatprep.subr.mxu0 0.0
    %297 = vmatpush2.msra.mxu0 0.0
    %298 = vmatprep.mubr.f32.mxu0 0.0
    %299 = vmatmul.mubr.f32.gmra.mxu0 %v232
    %v300 = vpop.f32.mrf.mxu0
    %v301 = vadd.f32 %v229, %v300
    %v302 = vpop.f32.mrf.mxu0
    %303 = vdwg.mxu0
    %v304 = vxor.u32 %v301, 2147483648
    %v305 = vmul.f32 %v304, 1.442695
    %v306 = vpow.pop %v305
    %v307 = vadd.f32 %v306, 1.0
    %v308 = vrcp.pop %v307
    %v309 = vmul.f32 1.0, %v308
    %v310 = vmul.f32 %v309, 0.909
    %v311 = vmul.f32 %v301, %v310
    %s312 = scalar_lea.vmem [#allocation2], 96
    %v313 = vld [vmem:[%s312] sm:$0xff]
    %v314 = vld [vmem:[%s312 + $0x8] sm:$0xff]
    %v315 = vld [vmem:[%s312 + $0x10] sm:$0xff]
    %v316 = vld [vmem:[%s312 + $0x18] sm:$0xff]
    %s317 = scalar_lea.vmem %s2, 3
    %v318 = vld [vmem:[%s317] sm:$0x1]
    %v320 = vlaneseq
    %v321 = vshrl.u32 %v320, 7
    %v322 = vsub.s32 0, %v321
    %v323 = vrot.slane %v318, %v322
    %v326 = vsel %vm136, %v311, 0
    %328 = vmatprep.subr.mxu0 0.0
    %329 = vmatpush1.msra.mxu0 0.0
    %330 = vmatprep.subr.mxu0 0.0
    %331 = vmatpush1.msra.mxu0 0.0
    %332 = vmatprep.subr.mxu0 0.0
    %333 = vmatpush1.msra.mxu0 0.0
    %334 = vmatprep.subr.mxu0 0.0
    %335 = vmatpush1.msra.mxu0 0.0
    %336 = vmatprep.subr.mxu0 0.0
    %337 = vmatpush1.msra.mxu0 0.0
    %338 = vmatprep.subr.mxu0 0.0
    %339 = vmatpush1.msra.mxu0 0.0
    %340 = vmatprep.subr.mxu0 0.0
    %341 = vmatpush1.msra.mxu0 0.0
    %342 = vmatprep.subr.mxu0 0.0
    %343 = vmatpush1.msra.mxu0 0.0
    %344 = vmatprep.subr.mxu0 0.0
    %345 = vmatpush1.msra.mxu0 0.0
    %346 = vmatprep.subr.mxu0 0.0
    %347 = vmatpush1.msra.mxu0 0.0
    %348 = vmatprep.subr.mxu0 0.0
    %349 = vmatpush1.msra.mxu0 0.0
    %350 = vmatprep.subr.mxu0 0.0
    %351 = vmatpush1.msra.mxu0 0.0
    %352 = vmatprep.subr.mxu0 0.0
    %353 = vmatpush1.msra.mxu0 %v316
    %354 = vmatprep.subr.mxu0 0.0
    %355 = vmatpush1.msra.mxu0 %v315
    %356 = vmatprep.subr.mxu0 0.0
    %357 = vmatpush1.msra.mxu0 %v314
    %358 = vmatprep.subr.mxu0 0.0
    %359 = vmatpush1.msra.mxu0 %v313
    %360 = vmatprep.subr.mxu0 0.0
    %361 = vmatpush2.msra.mxu0 0.0
    %362 = vmatprep.subr.mxu0 0.0
    %363 = vmatpush2.msra.mxu0 0.0
    %364 = vmatprep.subr.mxu0 0.0
    %365 = vmatpush2.msra.mxu0 0.0
    %366 = vmatprep.subr.mxu0 0.0
    %367 = vmatpush2.msra.mxu0 0.0
    %368 = vmatprep.subr.mxu0 0.0
    %369 = vmatpush2.msra.mxu0 0.0
    %370 = vmatprep.subr.mxu0 0.0
    %371 = vmatpush2.msra.mxu0 0.0
    %372 = vmatprep.subr.mxu0 0.0
    %373 = vmatpush2.msra.mxu0 0.0
    %374 = vmatprep.subr.mxu0 0.0
    %375 = vmatpush2.msra.mxu0 0.0
    %376 = vmatprep.subr.mxu0 0.0
    %377 = vmatpush2.msra.mxu0 0.0
    %378 = vmatprep.subr.mxu0 0.0
    %379 = vmatpush2.msra.mxu0 0.0
    %380 = vmatprep.subr.mxu0 0.0
    %381 = vmatpush2.msra.mxu0 0.0
    %382 = vmatprep.subr.mxu0 0.0
    %383 = vmatpush2.msra.mxu0 0.0
    %384 = vmatprep.subr.mxu0 0.0
    %385 = vmatpush2.msra.mxu0 0.0
    %386 = vmatprep.subr.mxu0 0.0
    %387 = vmatpush2.msra.mxu0 0.0
    %388 = vmatprep.subr.mxu0 0.0
    %389 = vmatpush2.msra.mxu0 0.0
    %390 = vmatprep.subr.mxu0 0.0
    %391 = vmatpush2.msra.mxu0 0.0
    %392 = vmatprep.mubr.f32.mxu0 0.0
    %393 = vmatmul.mubr.f32.gmra.mxu0 %v326
    %v394 = vpop.f32.mrf.mxu0
    %v395 = vadd.f32 %v323, %v394
    %v396 = vpop.f32.mrf.mxu0
    %397 = vdwg.mxu0
    %398 = vst.msk [vmem:[%s3] sm:$0xff] %vm37, %v395
    // Predicated region
    $region18: #{tpu_custom_call.1} parent=1 // pred_check
      _
    $region19: #{tpu_custom_call.1} parent=1 // pred_check_branch
      %400 = sbr.rel (0) target = $region21
    $region20: #{tpu_custom_call.1} parent=1 // pred_region
      _
    $region21: #{tpu_custom_call.1} parent=1 // pred_fallthru
      _
    // Predicated region
    $region22: #{tpu_custom_call.1} parent=1 // pred_check
      _
    $region23: #{tpu_custom_call.1} parent=1 // pred_check_branch
      %402 = sbr.rel (0) target = $region25
    $region24: #{tpu_custom_call.1} parent=1 // pred_region
      _
    $region25: #{tpu_custom_call.1} parent=1 // pred_fallthru
      _
    %403 = vsyncpa [#allocation3], 1

</llo_original>
